<compile_context>
chip_gen: v6e
topology: v6e:2x2x1
jax: 0.10.0
libtpu: 0.0.40
codegen_flags: <defaults>
</compile_context>

<pallas_src>
import functools

import jax
import jax.numpy as jnp
from jax import lax
from jax.experimental import pallas as pl
from jax.experimental.pallas import tpu as pltpu


def _round_up(x, m):
    return ((x + m - 1) // m) * m


def _attn_output_kernel(x_ref, res_ref, w_ref, vecs_ref, o_ref, *, eps):
    # x_ref:   (TM, H)   row-tile of hidden_states (streamed)
    # res_ref: (TM, H)   row-tile of input_tensor / residual (streamed)
    # w_ref:   (H, H)    dense weight, pre-transposed so y = x @ w   (resident)
    # vecs_ref:(3, H)    [dense bias; LN gamma; LN beta]             (resident)

    # Linear on the MXU: operands stay in their native dtype, accumulate in f32.
    y = jnp.dot(x_ref[...], w_ref[...], preferred_element_type=jnp.float32)

    vecs = vecs_ref[...].astype(jnp.float32)        # (3, H), tiny
    bias = vecs[0:1, :]
    gamma = vecs[1:2, :]
    beta = vecs[2:3, :]

    # Dropout (inference) -> identity; add bias + residual in f32.
    y = y + bias + res_ref[...].astype(jnp.float32)

    # LayerNorm over the hidden (lane) axis, eps = 1e-12.
    mean = jnp.mean(y, axis=-1, keepdims=True)
    centered = y - mean
    var = jnp.mean(centered * centered, axis=-1, keepdims=True)
    out = centered * lax.rsqrt(var + eps) * gamma + beta

    o_ref[...] = out.astype(o_ref.dtype)


def prepare_params(params, compute_dtype=None):
    """One-time prep: transpose the dense weight and fuse the small vectors.

    Do this at init, not per forward call, so no per-call XLA transpose of (H, H).
    Optionally cast the weight to `compute_dtype` (e.g. bf16) for the native MXU path.
    """
    w_t = params["dense_w"].T                         # (H, H): x @ w_t == x @ W^T
    if compute_dtype is not None:
        w_t = w_t.astype(compute_dtype)
    vecs = jnp.stack(
        [params["dense_b"], params["ln_g"], params["ln_b"]], axis=0
    ).astype(jnp.float32)                             # (3, H)
    return {"w_t": jnp.asarray(w_t), "vecs": vecs}


def lxmert_attention_output(hidden_states, input_tensor, prepared, *, eps=1e-12,
                            row_tile=None):
    """hidden_states, input_tensor: (B, S, H). prepared: output of prepare_params."""
    B, S, H = hidden_states.shape
    M = B * S
    dtype = hidden_states.dtype
    itemsize = jnp.dtype(dtype).itemsize

    # Sublane packing: 16 rows per vreg for 16-bit dtypes, 8 for 32-bit.
    sub = 16 if itemsize == 2 else 8
    if row_tile is None:
        row_tile = 512 if itemsize == 2 else 256

    # Tile must be a sublane multiple; never exceed the (padded) row count.
    tm = max(sub, min(_round_up(row_tile, sub), _round_up(M, sub)))
    Mp = _round_up(M, tm)

    x2 = hidden_states.reshape(M, H)
    r2 = input_tensor.reshape(M, H)
    if Mp != M:
        pad = Mp - M
        x2 = jnp.pad(x2, ((0, pad), (0, 0)))
        r2 = jnp.pad(r2, ((0, pad), (0, 0)))

    w_t = prepared["w_t"]
    vecs = prepared["vecs"]

    # VMEM budget: double-buffered weight alloc + 2 streamed inputs + output
    # (each double-buffered) + the small fused vector block.  Cap at 64 MiB so the
    # same sizing holds on v7x (64 MiB physical per TC) as well as v5e/v6e.
    w_bytes = 2 * H * H * w_t.dtype.itemsize
    tile_bytes = 3 * 2 * tm * H * 4            # x, residual, output buffers (f32 bound)
    vec_bytes = 2 * 8 * H * 4
    est = w_bytes + tile_bytes + vec_bytes
    vmem_limit = int(min(64 * 1024 * 1024, max(32 * 1024 * 1024, 2 * est)))

    kernel = functools.partial(_attn_output_kernel, eps=eps)

    out2 = pl.pallas_call(
        kernel,
        out_shape=jax.ShapeDtypeStruct((Mp, H), dtype),
        grid_spec=pltpu.PrefetchScalarGridSpec(
            num_scalar_prefetch=0,
            grid=(Mp // tm,),
            in_specs=[
                pl.BlockSpec((tm, H), lambda i: (i, 0)),   # hidden_states tile (streamed)
                pl.BlockSpec((tm, H), lambda i: (i, 0)),   # residual tile (streamed)
                pl.BlockSpec((H, H), lambda i: (0, 0)),    # dense weight (resident)
                pl.BlockSpec((3, H), lambda i: (0, 0)),    # fused bias/gamma/beta (resident)
            ],
            out_specs=pl.BlockSpec((tm, H), lambda i: (i, 0)),
        ),
        compiler_params=pltpu.CompilerParams(
            dimension_semantics=("parallel",),
            vmem_limit_bytes=vmem_limit,
        ),
    )(x2, r2, w_t, vecs)

    return out2[:M].reshape(B, S, H)


def init_params(key, hidden_size):
    k1, k2, _ = jax.random.split(key, 3)
    bound = 1.0 / jnp.sqrt(hidden_size)
    return {
        "dense_w": jax.random.uniform(k1, (hidden_size, hidden_size),
                                      jnp.float32, -bound, bound),
        "dense_b": jax.random.uniform(k2, (hidden_size,),
                                      jnp.float32, -bound, bound),
        "ln_g": jnp.ones((hidden_size,), jnp.float32),
        "ln_b": jnp.zeros((hidden_size,), jnp.float32),
    }


def _reference(hidden_states, input_tensor, params, eps=1e-12):
    y = jnp.einsum("bsh,oh->bso", hidden_states, params["dense_w"]) + params["dense_b"]
    y = y + input_tensor
    mean = jnp.mean(y, axis=-1, keepdims=True)
    var = jnp.mean((y - mean) ** 2, axis=-1, keepdims=True)
    return (y - mean) * lax.rsqrt(var + eps) * params["ln_g"] + params["ln_b"]


if __name__ == "__main__":
    key = jax.random.PRNGKey(0)
    k_x, k_r, k_p = jax.random.split(key, 3)

    batch, seq, hidden = 2, 8, 32
    hidden_states = jax.random.normal(k_x, (batch, seq, hidden), jnp.float32)
    input_tensor = jax.random.normal(k_r, (batch, seq, hidden), jnp.float32)
    params = init_params(k_p, hidden)
    prepared = prepare_params(params)          # one-time: transpose W, fuse vectors

    out = lxmert_attention_output(hidden_states, input_tensor, prepared)
    out = jax.block_until_ready(out)

    ref = _reference(hidden_states, input_tensor, params)
    assert out.shape == (batch, seq, hidden)
    assert jnp.allclose(out, ref, atol=1e-5, rtol=1e-5), "mismatch vs reference"

    # Exercise the multi-tile / padded path as well (M = 2*50 = 100, not a tile multiple).
    b2, s2 = 2, 50
    hs2 = jax.random.normal(k_x, (b2, s2, hidden), jnp.float32)
    it2 = jax.random.normal(k_r, (b2, s2, hidden), jnp.float32)
    out2 = jax.block_until_ready(
        lxmert_attention_output(hs2, it2, prepared, row_tile=16))
    ref2 = _reference(hs2, it2, params)
    assert jnp.allclose(out2, ref2, atol=1e-5, rtol=1e-5), "mismatch (padded path)"

    print("KERNEL_OK")
</pallas_src>

<mosaic_0001>
module attributes {stable_mosaic.version = 11 : i64} {
  func.func @_attn_output_kernel(%arg0: i32, %arg1: memref<16x32xf32, #tpu.memory_space<vmem>>, %arg2: memref<16x32xf32, #tpu.memory_space<vmem>>, %arg3: memref<32x32xf32, #tpu.memory_space<vmem>>, %arg4: memref<3x32xf32, #tpu.memory_space<vmem>>, %arg5: memref<16x32xf32, #tpu.memory_space<vmem>>) attributes {dimension_semantics = [#tpu.dimension_semantics<parallel>], iteration_bounds = array<i64: 1>, scalar_prefetch = 0 : i64, scratch_operands = 0 : i64, tpu.core_type = #tpu.core_type<tc>, window_params = [{transform_indices = @transform_0, window_bounds = array<i64: 16, 32>}, {transform_indices = @transform_1, window_bounds = array<i64: 16, 32>}, {pipeline_mode = #tpu.pipeline_mode<synchronous>, transform_indices = @transform_2, window_bounds = array<i64: 32, 32>}, {pipeline_mode = #tpu.pipeline_mode<synchronous>, transform_indices = @transform_3, window_bounds = array<i64: 3, 32>}, {transform_indices = @transform_4, window_bounds = array<i64: 16, 32>}]} {
    %c0 = arith.constant 0 : index
    %c0_0 = arith.constant 0 : index
    %0 = vector.load %arg1[%c0, %c0_0] : memref<16x32xf32, #tpu.memory_space<vmem>>, vector<16x32xf32>
    %c0_1 = arith.constant 0 : index
    %c0_2 = arith.constant 0 : index
    %1 = vector.load %arg3[%c0_1, %c0_2] : memref<32x32xf32, #tpu.memory_space<vmem>>, vector<32x32xf32>
    %cst = arith.constant dense<0.000000e+00> : vector<16x32xf32>
    %2 = tpu.matmul %0, %1, %cst {dimension_numbers = #tpu.dot_dimension_numbers<[1], [0], [0], [1], [0, 0, 1, 1], [], []>} : vector<16x32xf32>, vector<32x32xf32>, vector<16x32xf32> -> vector<16x32xf32>
    %c0_3 = arith.constant 0 : index
    %c0_4 = arith.constant 0 : index
    %3 = vector.load %arg4[%c0_3, %c0_4] : memref<3x32xf32, #tpu.memory_space<vmem>>, vector<3x32xf32>
    %4 = vector.extract_strided_slice %3 {offsets = [0, 0], sizes = [1, 32], strides = [1, 1]} : vector<3x32xf32> to vector<1x32xf32>
    %5 = vector.extract_strided_slice %3 {offsets = [1, 0], sizes = [1, 32], strides = [1, 1]} : vector<3x32xf32> to vector<1x32xf32>
    %6 = vector.extract_strided_slice %3 {offsets = [2, 0], sizes = [1, 32], strides = [1, 1]} : vector<3x32xf32> to vector<1x32xf32>
    %7 = vector.broadcast %4 : vector<1x32xf32> to vector<16x32xf32>
    %8 = arith.addf %2, %7 : vector<16x32xf32>
    %c0_5 = arith.constant 0 : index
    %c0_6 = arith.constant 0 : index
    %9 = vector.load %arg2[%c0_5, %c0_6] : memref<16x32xf32, #tpu.memory_space<vmem>>, vector<16x32xf32>
    %10 = arith.addf %8, %9 : vector<16x32xf32>
    %cst_7 = arith.constant dense<0.000000e+00> : vector<16xf32>
    %11 = vector.multi_reduction <add>, %10, %cst_7 [1] : vector<16x32xf32> to vector<16xf32>
    %12 = vector.shape_cast %11 : vector<16xf32> to vector<16x1xf32>
    %cst_8 = arith.constant 3.200000e+01 : f32
    %13 = vector.broadcast %cst_8 : f32 to vector<16x1xf32>
    %14 = arith.divf %12, %13 : vector<16x1xf32>
    %15 = vector.broadcast %14 : vector<16x1xf32> to vector<16x32xf32>
    %16 = arith.subf %10, %15 : vector<16x32xf32>
    %17 = arith.mulf %16, %16 : vector<16x32xf32>
    %cst_9 = arith.constant dense<0.000000e+00> : vector<16xf32>
    %18 = vector.multi_reduction <add>, %17, %cst_9 [1] : vector<16x32xf32> to vector<16xf32>
    %19 = vector.shape_cast %18 : vector<16xf32> to vector<16x1xf32>
    %cst_10 = arith.constant 3.200000e+01 : f32
    %20 = vector.broadcast %cst_10 : f32 to vector<16x1xf32>
    %21 = arith.divf %19, %20 : vector<16x1xf32>
    %cst_11 = arith.constant 9.99999996E-13 : f32
    %22 = vector.broadcast %cst_11 : f32 to vector<16x1xf32>
    %23 = arith.addf %21, %22 : vector<16x1xf32>
    %24 = math.rsqrt %23 : vector<16x1xf32>
    %25 = vector.broadcast %24 : vector<16x1xf32> to vector<16x32xf32>
    %26 = arith.mulf %16, %25 : vector<16x32xf32>
    %27 = vector.broadcast %5 : vector<1x32xf32> to vector<16x32xf32>
    %28 = arith.mulf %26, %27 : vector<16x32xf32>
    %29 = vector.broadcast %6 : vector<1x32xf32> to vector<16x32xf32>
    %30 = arith.addf %28, %29 : vector<16x32xf32>
    %c0_12 = arith.constant 0 : index
    %c0_13 = arith.constant 0 : index
    %31 = vector.load %arg5[%c0_12, %c0_13] : memref<16x32xf32, #tpu.memory_space<vmem>>, vector<16x32xf32>
    tpu.vector_store %arg5[%c0_12, %c0_13], %30 {strides = array<i32>} : memref<16x32xf32, #tpu.memory_space<vmem>>, vector<16x32xf32>,
    return
  }
  func.func @transform_0(%arg0: i32) -> (i32, i32) {
    %c0_i32 = arith.constant 0 : i32
    %c0_i32_0 = arith.constant 0 : i32
    return %arg0, %c0_i32 : i32, i32
  }
  func.func @transform_1(%arg0: i32) -> (i32, i32) {
    %c0_i32 = arith.constant 0 : i32
    %c0_i32_0 = arith.constant 0 : i32
    return %arg0, %c0_i32 : i32, i32
  }
  func.func @transform_2(%arg0: i32) -> (i32, i32) {
    %c0_i32 = arith.constant 0 : i32
    %c0_i32_0 = arith.constant 0 : i32
    %c0_i32_1 = arith.constant 0 : i32
    return %c0_i32, %c0_i32_0 : i32, i32
  }
  func.func @transform_3(%arg0: i32) -> (i32, i32) {
    %c0_i32 = arith.constant 0 : i32
    %c0_i32_0 = arith.constant 0 : i32
    %c0_i32_1 = arith.constant 0 : i32
    return %c0_i32, %c0_i32_0 : i32, i32
  }
  func.func @transform_4(%arg0: i32) -> (i32, i32) {
    %c0_i32 = arith.constant 0 : i32
    %c0_i32_0 = arith.constant 0 : i32
    return %arg0, %c0_i32 : i32, i32
  }
}

</mosaic_0001>

<llo_original>
// kernel: tpu_custom_call.1
$region0: #{tpu_custom_call.1}
  #allocation0 [shape = 'u32[]', space=smem, size = 0x4, offset = 0x4, fixed_abs, tag = 'smem constant byte address 0x4 - core index']
  #allocation1 [shape = 'u32[144,128]{1,0:T(1,128)}', space=vmem, size = 0x12000, scoped, tag = 'internal scratch']
  %s0 = inlined_call_operand.hbm [shape: f32[16,32], index: 0, kind: input, shape index: {}]
  %s1 = inlined_call_operand.hbm [shape: f32[16,32], index: 1, kind: input, shape index: {}]
  %s2 = inlined_call_operand.hbm [shape: f32[32,32], index: 2, kind: input, shape index: {}]
  %s3 = inlined_call_operand.vmem [shape: f32[3,32], index: 3, kind: input, shape index: {}]
  %s4 = inlined_call_operand.hbm [shape: f32[16,32], index: 4, kind: output, shape index: {}]
  %s5 = sld [smem:[#allocation0]]
  $region38: #{tpu_custom_call.1} parent=0
    _
  %s7 = ssub.s32 1, %s5
  %s8 = scalar_select 0, %s7, %s5
  $region1: #{tpu_custom_call.1} parent=0
    #allocation2 [shape = 'u8[8192]{0}', space=vmem, size = 0x2000, scoped, tag = 'input window, operand 0, single buffered']
    #allocation3 [shape = 's32[1]{0}', space=sflag, size = 0x4, scoped, tag = 'scoped memory for tpu_custom_call.1']
    #allocation4 [shape = 's32[1]{0}', space=sflag, size = 0x4, scoped, tag = 'scoped memory for tpu_custom_call.1']
    #allocation5 [shape = 'u8[8192]{0}', space=vmem, size = 0x2000, scoped, tag = 'input window, operand 1, single buffered']
    #allocation6 [shape = 's32[1]{0}', space=sflag, size = 0x4, scoped, tag = 'scoped memory for tpu_custom_call.1']
    #allocation7 [shape = 'u8[16384]{0}', space=vmem, size = 0x4000, scoped, tag = 'input window, operand 2, single buffered']
    #allocation8 [shape = 'u8[8192]{0}', space=vmem, size = 0x2000, scoped, tag = 'output window, operand 0, single buffered']
    %9 = vsyncpa [#allocation3], 0
    %10 = vsyncpa [#allocation6], 0
    %11 = vsyncpa [#allocation4], 0
    // Predicated region
    $region2: #{tpu_custom_call.1} parent=1 // pred_check
      _
    $region3: #{tpu_custom_call.1} parent=1 // pred_check_branch
      %13 = sbr.rel (0) target = $region5
    $region4: #{tpu_custom_call.1} parent=1 // pred_region
      %s15 = ssub.s32 256, 256
      %16 = vsyncadd [#allocation3], %s15
      %s17 = sshll.u32 [#allocation2], 4
      %s18 = int_to_ptr.vmem [resolvable:$true] %s17
      %23 = dma.hbm_to_vmem [thread:$0]  %s0, 256, %s18, [#allocation3], 128, 128, 8
    $region5: #{tpu_custom_call.1} parent=1 // pred_fallthru
      _
    // Predicated region
    $region6: #{tpu_custom_call.1} parent=1 // pred_check
      _
    $region7: #{tpu_custom_call.1} parent=1 // pred_check_branch
      %25 = sbr.rel (0) target = $region9
    $region8: #{tpu_custom_call.1} parent=1 // pred_region
      %s27 = ssub.s32 256, 256
      %28 = vsyncadd [#allocation6], %s27
      %s29 = sshll.u32 [#allocation5], 4
      %s30 = int_to_ptr.vmem [resolvable:$true] %s29
      %35 = dma.hbm_to_vmem [thread:$0]  %s1, 256, %s30, [#allocation6], 128, 128, 8
    $region9: #{tpu_custom_call.1} parent=1 // pred_fallthru
      _
    // Predicated region
    $region10: #{tpu_custom_call.1} parent=1 // pred_check
      _
    $region11: #{tpu_custom_call.1} parent=1 // pred_check_branch
      %37 = sbr.rel (0) target = $region13
    $region12: #{tpu_custom_call.1} parent=1 // pred_region
      %s39 = ssub.s32 512, 512
      %40 = vsyncadd [#allocation6], %s39
      %s41 = sshll.u32 [#allocation7], 4
      %s42 = int_to_ptr.vmem [resolvable:$true] %s41
      %47 = dma.hbm_to_vmem [thread:$0]  %s2, 512, %s42, [#allocation6], 128, 128, 8
    $region13: #{tpu_custom_call.1} parent=1 // pred_fallthru
      _
    // Predicated region
    $region14: #{tpu_custom_call.1} parent=1 // pred_check
      _
    $region15: #{tpu_custom_call.1} parent=1 // pred_check_branch
      %49 = sbr.rel (0) target = $region17
    $region16: #{tpu_custom_call.1} parent=1 // pred_region
      _
    $region17: #{tpu_custom_call.1} parent=1 // pred_fallthru
      _
    // Predicated region
    $region18: #{tpu_custom_call.1} parent=1 // pred_check
      _
    $region19: #{tpu_custom_call.1} parent=1 // pred_check_branch
      %51 = sbr.rel (0) target = $region21
    $region20: #{tpu_custom_call.1} parent=1 // pred_region
      %52 = dma.done [#allocation3], 256
    $region21: #{tpu_custom_call.1} parent=1 // pred_fallthru
      _
    // Predicated region
    $region22: #{tpu_custom_call.1} parent=1 // pred_check
      _
    $region23: #{tpu_custom_call.1} parent=1 // pred_check_branch
      %54 = sbr.rel (0) target = $region25
    $region24: #{tpu_custom_call.1} parent=1 // pred_region
      %55 = dma.done [#allocation6], 256
    $region25: #{tpu_custom_call.1} parent=1 // pred_fallthru
      _
    // Predicated region
    $region26: #{tpu_custom_call.1} parent=1 // pred_check
      _
    $region27: #{tpu_custom_call.1} parent=1 // pred_check_branch
      %57 = sbr.rel (0) target = $region29
    $region28: #{tpu_custom_call.1} parent=1 // pred_region
      %58 = dma.done [#allocation6], 512
    $region29: #{tpu_custom_call.1} parent=1 // pred_fallthru
      _
    %v59 = vld [vmem:[#allocation2] sm:$0xff]
    %v60 = vld [vmem:[#allocation2 + $0x8] sm:$0xff]
    %v61 = vld [vmem:[#allocation7] sm:$0xff]
    %v62 = vld [vmem:[#allocation7 + $0x8] sm:$0xff]
    %v63 = vld [vmem:[#allocation7 + $0x10] sm:$0xff]
    %v64 = vld [vmem:[#allocation7 + $0x18] sm:$0xff]
    %v65 = vld [vmem:[%s3] sm:$0x7]
    %v66 = vlaneseq
    %v67 = vshrl.u32 %v66, 7
    %v68 = vsub.s32 0, %v67
    %v69 = vrot.slane %v65, %v68
    %vm70 = vcmask 261120
    %v72 = vsel %vm70, %v59, 0
    %v75 = vsel %vm70, %v60, 0
    %77 = vmatprep.subr.mxu0 0.0
    %78 = vmatpush1.msra.mxu0 0.0
    %79 = vmatprep.subr.mxu0 0.0
    %80 = vmatpush1.msra.mxu0 0.0
    %81 = vmatprep.subr.mxu0 0.0
    %82 = vmatpush1.msra.mxu0 0.0
    %83 = vmatprep.subr.mxu0 0.0
    %84 = vmatpush1.msra.mxu0 0.0
    %85 = vmatprep.subr.mxu0 0.0
    %86 = vmatpush1.msra.mxu0 0.0
    %87 = vmatprep.subr.mxu0 0.0
    %88 = vmatpush1.msra.mxu0 0.0
    %89 = vmatprep.subr.mxu0 0.0
    %90 = vmatpush1.msra.mxu0 0.0
    %91 = vmatprep.subr.mxu0 0.0
    %92 = vmatpush1.msra.mxu0 0.0
    %93 = vmatprep.subr.mxu0 0.0
    %94 = vmatpush1.msra.mxu0 0.0
    %95 = vmatprep.subr.mxu0 0.0
    %96 = vmatpush1.msra.mxu0 0.0
    %97 = vmatprep.subr.mxu0 0.0
    %98 = vmatpush1.msra.mxu0 0.0
    %99 = vmatprep.subr.mxu0 0.0
    %100 = vmatpush1.msra.mxu0 0.0
    %101 = vmatprep.subr.mxu0 0.0
    %102 = vmatpush1.msra.mxu0 %v64
    %103 = vmatprep.subr.mxu0 0.0
    %104 = vmatpush1.msra.mxu0 %v63
    %105 = vmatprep.subr.mxu0 0.0
    %106 = vmatpush1.msra.mxu0 %v62
    %107 = vmatprep.subr.mxu0 0.0
    %108 = vmatpush1.msra.mxu0 %v61
    %109 = vmatprep.subr.mxu0 0.0
    %110 = vmatpush2.msra.mxu0 0.0
    %111 = vmatprep.subr.mxu0 0.0
    %112 = vmatpush2.msra.mxu0 0.0
    %113 = vmatprep.subr.mxu0 0.0
    %114 = vmatpush2.msra.mxu0 0.0
    %115 = vmatprep.subr.mxu0 0.0
    %116 = vmatpush2.msra.mxu0 0.0
    %117 = vmatprep.subr.mxu0 0.0
    %118 = vmatpush2.msra.mxu0 0.0
    %119 = vmatprep.subr.mxu0 0.0
    %120 = vmatpush2.msra.mxu0 0.0
    %121 = vmatprep.subr.mxu0 0.0
    %122 = vmatpush2.msra.mxu0 0.0
    %123 = vmatprep.subr.mxu0 0.0
    %124 = vmatpush2.msra.mxu0 0.0
    %125 = vmatprep.subr.mxu0 0.0
    %126 = vmatpush2.msra.mxu0 0.0
    %127 = vmatprep.subr.mxu0 0.0
    %128 = vmatpush2.msra.mxu0 0.0
    %129 = vmatprep.subr.mxu0 0.0
    %130 = vmatpush2.msra.mxu0 0.0
    %131 = vmatprep.subr.mxu0 0.0
    %132 = vmatpush2.msra.mxu0 0.0
    %133 = vmatprep.subr.mxu0 0.0
    %134 = vmatpush2.msra.mxu0 0.0
    %135 = vmatprep.subr.mxu0 0.0
    %136 = vmatpush2.msra.mxu0 0.0
    %137 = vmatprep.subr.mxu0 0.0
    %138 = vmatpush2.msra.mxu0 0.0
    %139 = vmatprep.subr.mxu0 0.0
    %140 = vmatpush2.msra.mxu0 0.0
    %141 = vmatprep.mubr.f32.mxu0 0.0
    %142 = vmatmul.mubr.f32.gmra.mxu0 %v72
    %v143 = vpop.f32.mrf.mxu0
    %v144 = vadd.f32 %v69, %v143
    %v145 = vpop.f32.mrf.mxu0
    %146 = vmatprep.mubr.f32.mxu0 0.0
    %147 = vmatmul.mubr.f32.gmra.mxu0 %v75
    %v148 = vpop.f32.mrf.mxu0
    %v149 = vadd.f32 %v69, %v148
    %v150 = vpop.f32.mrf.mxu0
    %151 = vdwg.mxu0
    %v152 = vld [vmem:[#allocation5] sm:$0xff]
    %v153 = vld [vmem:[#allocation5 + $0x8] sm:$0xff]
    %v154 = vadd.f32 %v144, %v152
    %v155 = vadd.f32 %v149, %v153
    %v156 = vsel %vm70, %v154, 0.0
    %157 = vadd.xlane.f32.xlu0 %v156
    %v158 = vpop.xlane.xlu0 %157
    %v159 = vsel %vm70, %v155, 0.0
    %160 = vadd.xlane.f32.xlu0 %v159
    %v161 = vpop.xlane.xlu0 %160
    %v162 = vrcp.pop 32.0
    %v163 = vmul.f32 %v158, %v162
    %v164 = vmul.f32 %v161, %v162
    %v165 = vsub.f32 %v154, %v163
    %v166 = vsub.f32 %v155, %v164
    %v167 = vmul.f32 %v165, %v165
    %v168 = vmul.f32 %v166, %v166
    %v169 = vsel %vm70, %v167, 0.0
    %170 = vadd.xlane.f32.xlu0 %v169
    %v171 = vpop.xlane.xlu0 %170
    %v172 = vsel %vm70, %v168, 0.0
    %173 = vadd.xlane.f32.xlu0 %v172
    %v174 = vpop.xlane.xlu0 %173
    %v175 = vmul.f32 %v171, %v162
    %v176 = vmul.f32 %v174, %v162
    %v177 = vadd.f32 %v175, 1e-12
    %v178 = vadd.f32 %v176, 1e-12
    %v179 = vrsqrt.pop %v177
    %v180 = vrsqrt.pop %v178
    %v181 = vmul.f32 %v165, %v179
    %v182 = vmul.f32 %v166, %v180
    %v183 = vlaneseq
    %v184 = vshrl.u32 %v183, 7
    %v185 = vsub.s32 1, %v184
    %v186 = vrot.slane %v65, %v185
    %v187 = vmul.f32 %v181, %v186
    %v188 = vmul.f32 %v182, %v186
    %v189 = vlaneseq
    %v190 = vshrl.u32 %v189, 7
    %v191 = vsub.s32 2, %v190
    %v192 = vrot.slane %v65, %v191
    %v193 = vadd.f32 %v187, %v192
    %v194 = vadd.f32 %v188, %v192
    %195 = vst.msk [vmem:[#allocation8] sm:$0xff] %vm70, %v193
    %196 = vst.msk [vmem:[#allocation8 + $0x8] sm:$0xff] %vm70, %v194
    // Predicated region
    $region30: #{tpu_custom_call.1} parent=1 // pred_check
      _
    $region31: #{tpu_custom_call.1} parent=1 // pred_check_branch
      %198 = sbr.rel (0) target = $region33
    $region32: #{tpu_custom_call.1} parent=1 // pred_region
      %s200 = ssub.s32 256, 256
      %201 = vsyncadd [#allocation4], %s200
      %s202 = sshll.u32 [#allocation8], 4
      %s203 = int_to_ptr.vmem [resolvable:$true] %s202
      %208 = dma.vmem_to_hbm [thread:$0]  %s203, 256, %s4, [#allocation4], 128, 128, 8
    $region33: #{tpu_custom_call.1} parent=1 // pred_fallthru
      _
    // Predicated region
    $region34: #{tpu_custom_call.1} parent=1 // pred_check
      _
    $region35: #{tpu_custom_call.1} parent=1 // pred_check_branch
      %210 = sbr.rel (0) target = $region37
    $region36: #{tpu_custom_call.1} parent=1 // pred_region
      %211 = dma.done [#allocation4], 256
    $region37: #{tpu_custom_call.1} parent=1 // pred_fallthru
      _
    %212 = vsyncpa [#allocation3], 1
    %213 = vsyncpa [#allocation6], 1
    %214 = vsyncpa [#allocation4], 1

</llo_original>
